<compile_context>
chip_gen: v6e
topology: v6e:2x2x1
jax: 0.10.0
libtpu: 0.0.40
codegen_flags: <defaults>
</compile_context>

<pallas_src>
import functools

import jax
import jax.numpy as jnp
from jax.experimental import pallas as pl
from jax.experimental.pallas import tpu as pltpu


def _downsample_fused_kernel(x_ref, w_ref, b_ref, g_ref, beta_ref, o_ref, z_ref,
                             *, pool: int, eps: float):
    """Fused Conv1d(k=3,p=1) + BatchNorm1d(batch stats) + MaxPool1d + ELU.

    x_ref:    (B*L, 3*D) bf16  im2col-ed input (tap-major channel blocks)
    w_ref:    (3*D, D)   bf16  flattened conv weight (tap-major rows)
    b_ref:    (1, D)     f32   conv bias
    g_ref:    (1, D)     f32   BN gamma
    beta_ref: (1, D)     f32   BN beta
    o_ref:    (B, L//pool, D) f32  output
    z_ref:    (B*L, D)   f32   VMEM scratch holding the BN-affine'd activation
    """
    B, l_out, _ = o_ref.shape
    L = x_ref.shape[0] // B
    n = jnp.float32(B * L)

    # ---- Conv1d as a single MXU matmul (f32 accumulation) + bias ----
    y = jnp.dot(x_ref[...], w_ref[...], preferred_element_type=jnp.float32)
    y = y + b_ref[...]

    # ---- BatchNorm1d training-mode statistics over all B*L rows (biased var) ----
    mean = jnp.sum(y, axis=0, keepdims=True) / n          # (1, D)
    yc = y - mean
    var = jnp.sum(yc * yc, axis=0, keepdims=True) / n     # centered -> no cancellation
    scale = g_ref[...] * jax.lax.rsqrt(var + eps)          # (1, D)
    shift = beta_ref[...] - mean * scale                   # (1, D)

    # ---- Folded BN affine (must precede max: per-channel scale may be negative) ----
    z_ref[...] = y * scale + shift

    # ---- MaxPool1d(pool) via strided sublane loads, then ELU (monotone => after max) ----
    for b in range(B):                                     # B is small & static
        m = z_ref[pl.ds(b * L, l_out, stride=pool), :]
        for i in range(1, pool):
            m = jnp.maximum(m, z_ref[pl.ds(b * L + i, l_out, stride=pool), :])
        o_ref[b, :, :] = jnp.where(m > 0.0, m, jnp.exp(jnp.minimum(m, 0.0)) - 1.0)


def _pick_vmem_limit(footprint_bytes: int):
    """Generation-aware VMEM limit.  Returns None when the default scoped limit suffices."""
    if footprint_bytes <= (12 << 20):        # comfortably inside the default scoped limit
        return None
    try:
        phys = int(getattr(pltpu.get_tpu_info(), "vmem_capacity_bytes", 64 << 20))
    except Exception:
        phys = 64 << 20                      # v7x per-TensorCore physical VMEM (smallest gen)
    budget = (phys * 7) // 10                # leave headroom for compiler-internal scratch
    if footprint_bytes > budget:
        # TODO(synk): batch-blocked two-pass fallback for activations larger than VMEM.
        raise ValueError(
            f"DownSampleLayer fused kernel needs ~{footprint_bytes} bytes of VMEM "
            f"but the budget on this TPU generation is {budget} bytes.")
    return int(min(footprint_bytes + (4 << 20), budget))


def downsample_layer(x, conv_w, conv_b, bn_gamma, bn_beta, *,
                     down_sample_scale: int, eps: float = 1e-5):
    """x: (B, L, D) f32.  conv_w: PyTorch layout (D_out, D_in, 3).  conv_b/gamma/beta: (D,).

    Returns (B, L // down_sample_scale, D) f32, matching DownSampleLayer.forward
    with training-mode (batch-statistic) BatchNorm1d.
    """
    B, L, D = x.shape
    pool = int(down_sample_scale)
    l_out = L // pool
    if l_out < 1:
        raise ValueError("sequence length shorter than down_sample_scale")

    # Wrapper-side im2col (cheap XLA, fuses with the pad/cast): output row l gets
    # [x[l-1], x[l], x[l+1]] concatenated along channels -> one K=3D matmul in-kernel.
    xb = jnp.pad(x.astype(jnp.bfloat16), ((0, 0), (1, 1), (0, 0)))
    x_col = jnp.concatenate(
        [xb[:, 0:L, :], xb[:, 1:L + 1, :], xb[:, 2:L + 2, :]],
        axis=-1).reshape(B * L, 3 * D)
    # PyTorch (D_out, D_in, 3) -> (3*D_in, D_out) with tap-major rows, matching x_col.
    w_col = jnp.transpose(conv_w, (2, 1, 0)).reshape(3 * D, D).astype(jnp.bfloat16)
    b_row = conv_b.astype(jnp.float32).reshape(1, D)
    g_row = bn_gamma.astype(jnp.float32).reshape(1, D)
    beta_row = bn_beta.astype(jnp.float32).reshape(1, D)

    # Everything (inputs, f32 activation, scratch, output) stays VMEM-resident.
    footprint = (x_col.size * 2 + w_col.size * 2      # bf16 inputs
                 + 3 * D * 4                          # bias / gamma / beta
                 + 2 * B * L * D * 4                  # f32 conv value + z scratch
                 + B * l_out * D * 4)                 # f32 output
    vmem_limit = _pick_vmem_limit(footprint)
    cp_kwargs = dict(dimension_semantics=("arbitrary",))
    if vmem_limit is not None:
        cp_kwargs["vmem_limit_bytes"] = vmem_limit

    kernel = functools.partial(_downsample_fused_kernel, pool=pool, eps=eps)
    return pl.pallas_call(
        kernel,
        out_shape=jax.ShapeDtypeStruct((B, l_out, D), jnp.float32),
        grid=(1,),
        in_specs=[
            pl.BlockSpec((B * L, 3 * D), lambda i: (0, 0)),
            pl.BlockSpec((3 * D, D), lambda i: (0, 0)),
            pl.BlockSpec((1, D), lambda i: (0, 0)),
            pl.BlockSpec((1, D), lambda i: (0, 0)),
            pl.BlockSpec((1, D), lambda i: (0, 0)),
        ],
        out_specs=pl.BlockSpec((B, l_out, D), lambda i: (0, 0, 0)),
        scratch_shapes=[pltpu.VMEM((B * L, D), jnp.float32)],
        compiler_params=pltpu.CompilerParams(**cp_kwargs),
    )(x_col, w_col, b_row, g_row, beta_row)


def _reference(x, conv_w, conv_b, gamma, beta, pool, eps=1e-5):
    """Pure-JAX f32 reference matching the PyTorch forward."""
    B, L, D = x.shape
    w = jnp.transpose(conv_w, (2, 1, 0))
    xp = jnp.pad(x, ((0, 0), (1, 1), (0, 0)))
    hp = jax.lax.Precision.HIGHEST
    y = (jnp.einsum('bld,de->ble', xp[:, 0:L, :], w[0], precision=hp)
         + jnp.einsum('bld,de->ble', xp[:, 1:L + 1, :], w[1], precision=hp)
         + jnp.einsum('bld,de->ble', xp[:, 2:L + 2, :], w[2], precision=hp)
         + conv_b)
    mean = jnp.mean(y, axis=(0, 1), keepdims=True)
    var = jnp.mean((y - mean) ** 2, axis=(0, 1), keepdims=True)
    y = (y - mean) * jax.lax.rsqrt(var + eps) * gamma + beta
    y = jnp.where(y > 0, y, jnp.exp(jnp.minimum(y, 0.0)) - 1.0)
    l_out = L // pool
    return jnp.max(y[:, :l_out * pool, :].reshape(B, l_out, pool, D), axis=2)


if __name__ == "__main__":
    key = jax.random.PRNGKey(0)
    # D = 128 keeps the channel (lane) axis fully dense.
    for (B, L, D, pool) in [(4, 32, 128, 2), (8, 64, 128, 4)]:
        key, k_x, k_w, k_b, k_g, k_be = jax.random.split(key, 6)
        x = jax.random.normal(k_x, (B, L, D), dtype=jnp.float32)

        # Shapes match nn.Conv1d(D, D, 3, padding=1) + nn.BatchNorm1d(D).
        fan_in = D * 3
        bound = 1.0 / (fan_in ** 0.5)
        conv_w = jax.random.uniform(k_w, (D, D, 3), jnp.float32, -bound, bound)
        conv_b = jax.random.uniform(k_b, (D,), jnp.float32, -bound, bound)
        bn_gamma = jax.random.uniform(k_g, (D,), jnp.float32, 0.5, 1.5)
        bn_beta = 0.1 * jax.random.normal(k_be, (D,), dtype=jnp.float32)

        fn = jax.jit(functools.partial(downsample_layer, down_sample_scale=pool))
        out = jax.block_until_ready(fn(x, conv_w, conv_b, bn_gamma, bn_beta))
        assert out.shape == (B, L // pool, D)

        ref = _reference(x, conv_w, conv_b, bn_gamma, bn_beta, pool)
        max_err = float(jnp.max(jnp.abs(out - ref)))
        assert bool(jnp.allclose(out, ref, rtol=5e-2, atol=5e-2)), (B, L, D, pool, max_err)

    print("KERNEL_OK")
</pallas_src>

<mosaic_0001>
module attributes {stable_mosaic.version = 11 : i64} {
  func.func @_downsample_fused_kernel(%arg0: i32, %arg1: memref<128x384xbf16, #tpu.memory_space<vmem>>, %arg2: memref<384x128xbf16, #tpu.memory_space<vmem>>, %arg3: memref<1x128xf32, #tpu.memory_space<vmem>>, %arg4: memref<1x128xf32, #tpu.memory_space<vmem>>, %arg5: memref<1x128xf32, #tpu.memory_space<vmem>>, %arg6: memref<4x16x128xf32, #tpu.memory_space<vmem>>, %arg7: memref<128x128xf32, #tpu.memory_space<vmem>>) attributes {dimension_semantics = [#tpu.dimension_semantics<arbitrary>], iteration_bounds = array<i64: 1>, scalar_prefetch = 0 : i64, scratch_operands = 1 : i64, tpu.core_type = #tpu.core_type<tc>, window_params = [{pipeline_mode = #tpu.pipeline_mode<synchronous>, transform_indices = @transform_0, window_bounds = array<i64: 128, 384>}, {pipeline_mode = #tpu.pipeline_mode<synchronous>, transform_indices = @transform_1, window_bounds = array<i64: 384, 128>}, {pipeline_mode = #tpu.pipeline_mode<synchronous>, transform_indices = @transform_2, window_bounds = array<i64: 1, 128>}, {pipeline_mode = #tpu.pipeline_mode<synchronous>, transform_indices = @transform_3, window_bounds = array<i64: 1, 128>}, {pipeline_mode = #tpu.pipeline_mode<synchronous>, transform_indices = @transform_4, window_bounds = array<i64: 1, 128>}, {pipeline_mode = #tpu.pipeline_mode<synchronous>, transform_indices = @transform_5, window_bounds = array<i64: 4, 16, 128>}]} {
    %c0 = arith.constant 0 : index
    %c0_0 = arith.constant 0 : index
    %0 = vector.load %arg1[%c0, %c0_0] : memref<128x384xbf16, #tpu.memory_space<vmem>>, vector<128x384xbf16>
    %c0_1 = arith.constant 0 : index
    %c0_2 = arith.constant 0 : index
    %1 = vector.load %arg2[%c0_1, %c0_2] : memref<384x128xbf16, #tpu.memory_space<vmem>>, vector<384x128xbf16>
    %cst = arith.constant dense<0.000000e+00> : vector<128x128xf32>
    %2 = tpu.matmul %0, %1, %cst {dimension_numbers = #tpu.dot_dimension_numbers<[1], [0], [0], [1], [0, 0, 1, 1], [], []>} : vector<128x384xbf16>, vector<384x128xbf16>, vector<128x128xf32> -> vector<128x128xf32>
    %c0_3 = arith.constant 0 : index
    %c0_4 = arith.constant 0 : index
    %3 = vector.load %arg3[%c0_3, %c0_4] : memref<1x128xf32, #tpu.memory_space<vmem>>, vector<1x128xf32>
    %4 = vector.broadcast %3 : vector<1x128xf32> to vector<128x128xf32>
    %5 = arith.addf %2, %4 : vector<128x128xf32>
    %cst_5 = arith.constant dense<0.000000e+00> : vector<128xf32>
    %6 = vector.multi_reduction <add>, %5, %cst_5 [0] : vector<128x128xf32> to vector<128xf32>
    %7 = vector.shape_cast %6 : vector<128xf32> to vector<1x128xf32>
    %cst_6 = arith.constant 1.280000e+02 : f32
    %8 = vector.broadcast %cst_6 : f32 to vector<1x128xf32>
    %9 = arith.divf %7, %8 : vector<1x128xf32>
    %10 = vector.broadcast %9 : vector<1x128xf32> to vector<128x128xf32>
    %11 = arith.subf %5, %10 : vector<128x128xf32>
    %12 = arith.mulf %11, %11 : vector<128x128xf32>
    %cst_7 = arith.constant dense<0.000000e+00> : vector<128xf32>
    %13 = vector.multi_reduction <add>, %12, %cst_7 [0] : vector<128x128xf32> to vector<128xf32>
    %14 = vector.shape_cast %13 : vector<128xf32> to vector<1x128xf32>
    %cst_8 = arith.constant 1.280000e+02 : f32
    %15 = vector.broadcast %cst_8 : f32 to vector<1x128xf32>
    %16 = arith.divf %14, %15 : vector<1x128xf32>
    %c0_9 = arith.constant 0 : index
    %c0_10 = arith.constant 0 : index
    %17 = vector.load %arg4[%c0_9, %c0_10] : memref<1x128xf32, #tpu.memory_space<vmem>>, vector<1x128xf32>
    %cst_11 = arith.constant 9.99999974E-6 : f32
    %18 = vector.broadcast %cst_11 : f32 to vector<1x128xf32>
    %19 = arith.addf %16, %18 : vector<1x128xf32>
    %20 = math.rsqrt %19 : vector<1x128xf32>
    %21 = arith.mulf %17, %20 : vector<1x128xf32>
    %c0_12 = arith.constant 0 : index
    %c0_13 = arith.constant 0 : index
    %22 = vector.load %arg5[%c0_12, %c0_13] : memref<1x128xf32, #tpu.memory_space<vmem>>, vector<1x128xf32>
    %23 = arith.mulf %9, %21 : vector<1x128xf32>
    %24 = arith.subf %22, %23 : vector<1x128xf32>
    %25 = vector.broadcast %21 : vector<1x128xf32> to vector<128x128xf32>
    %26 = arith.mulf %5, %25 : vector<128x128xf32>
    %27 = vector.broadcast %24 : vector<1x128xf32> to vector<128x128xf32>
    %28 = arith.addf %26, %27 : vector<128x128xf32>
    %c0_14 = arith.constant 0 : index
    %c0_15 = arith.constant 0 : index
    %29 = vector.load %arg7[%c0_14, %c0_15] : memref<128x128xf32, #tpu.memory_space<vmem>>, vector<128x128xf32>
    tpu.vector_store %arg7[%c0_14, %c0_15], %28 {strides = array<i32>} : memref<128x128xf32, #tpu.memory_space<vmem>>, vector<128x128xf32>,
    %c0_16 = arith.constant 0 : index
    %c0_17 = arith.constant 0 : index
    %30 = tpu.strided_load %arg7[%c0_16, %c0_17] {strides = array<i32: 2, 1>} : memref<128x128xf32, #tpu.memory_space<vmem>>, vector<16x128xf32>
    %c1 = arith.constant 1 : index
    %c0_18 = arith.constant 0 : index
    %31 = tpu.strided_load %arg7[%c1, %c0_18] {strides = array<i32: 2, 1>} : memref<128x128xf32, #tpu.memory_space<vmem>>, vector<16x128xf32>
    %32 = arith.maximumf %30, %31 : vector<16x128xf32>
    %cst_19 = arith.constant 0.000000e+00 : f32
    %33 = vector.broadcast %cst_19 : f32 to vector<16x128xf32>
    %34 = arith.cmpf ogt, %32, %33 : vector<16x128xf32>
    %cst_20 = arith.constant 0.000000e+00 : f32
    %35 = vector.broadcast %cst_20 : f32 to vector<16x128xf32>
    %36 = arith.minimumf %32, %35 : vector<16x128xf32>
    %37 = math.exp %36 : vector<16x128xf32>
    %cst_21 = arith.constant 1.000000e+00 : f32
    %38 = vector.broadcast %cst_21 : f32 to vector<16x128xf32>
    %39 = arith.subf %37, %38 : vector<16x128xf32>
    %40 = arith.select %34, %32, %39 : vector<16x128xi1>, vector<16x128xf32>
    %c0_22 = arith.constant 0 : index
    %c0_23 = arith.constant 0 : index
    %c0_24 = arith.constant 0 : index
    %41 = vector.load %arg6[%c0_22, %c0_23, %c0_24] : memref<4x16x128xf32, #tpu.memory_space<vmem>>, vector<1x16x128xf32>
    %42 = vector.shape_cast %41 : vector<1x16x128xf32> to vector<16x128xf32>
    %43 = vector.shape_cast %40 : vector<16x128xf32> to vector<1x16x128xf32>
    tpu.vector_store %arg6[%c0_22, %c0_23, %c0_24], %43 {strides = array<i32>} : memref<4x16x128xf32, #tpu.memory_space<vmem>>, vector<1x16x128xf32>,
    %c32 = arith.constant 32 : index
    %c0_25 = arith.constant 0 : index
    %44 = tpu.strided_load %arg7[%c32, %c0_25] {strides = array<i32: 2, 1>} : memref<128x128xf32, #tpu.memory_space<vmem>>, vector<16x128xf32>
    %c33 = arith.constant 33 : index
    %c0_26 = arith.constant 0 : index
    %45 = tpu.strided_load %arg7[%c33, %c0_26] {strides = array<i32: 2, 1>} : memref<128x128xf32, #tpu.memory_space<vmem>>, vector<16x128xf32>
    %46 = arith.maximumf %44, %45 : vector<16x128xf32>
    %cst_27 = arith.constant 0.000000e+00 : f32
    %47 = vector.broadcast %cst_27 : f32 to vector<16x128xf32>
    %48 = arith.cmpf ogt, %46, %47 : vector<16x128xf32>
    %cst_28 = arith.constant 0.000000e+00 : f32
    %49 = vector.broadcast %cst_28 : f32 to vector<16x128xf32>
    %50 = arith.minimumf %46, %49 : vector<16x128xf32>
    %51 = math.exp %50 : vector<16x128xf32>
    %cst_29 = arith.constant 1.000000e+00 : f32
    %52 = vector.broadcast %cst_29 : f32 to vector<16x128xf32>
    %53 = arith.subf %51, %52 : vector<16x128xf32>
    %54 = arith.select %48, %46, %53 : vector<16x128xi1>, vector<16x128xf32>
    %c1_30 = arith.constant 1 : index
    %c0_31 = arith.constant 0 : index
    %c0_32 = arith.constant 0 : index
    %55 = vector.load %arg6[%c1_30, %c0_31, %c0_32] : memref<4x16x128xf32, #tpu.memory_space<vmem>>, vector<1x16x128xf32>
    %56 = vector.shape_cast %55 : vector<1x16x128xf32> to vector<16x128xf32>
    %57 = vector.shape_cast %54 : vector<16x128xf32> to vector<1x16x128xf32>
    tpu.vector_store %arg6[%c1_30, %c0_31, %c0_32], %57 {strides = array<i32>} : memref<4x16x128xf32, #tpu.memory_space<vmem>>, vector<1x16x128xf32>,
    %c64 = arith.constant 64 : index
    %c0_33 = arith.constant 0 : index
    %58 = tpu.strided_load %arg7[%c64, %c0_33] {strides = array<i32: 2, 1>} : memref<128x128xf32, #tpu.memory_space<vmem>>, vector<16x128xf32>
    %c65 = arith.constant 65 : index
    %c0_34 = arith.constant 0 : index
    %59 = tpu.strided_load %arg7[%c65, %c0_34] {strides = array<i32: 2, 1>} : memref<128x128xf32, #tpu.memory_space<vmem>>, vector<16x128xf32>
    %60 = arith.maximumf %58, %59 : vector<16x128xf32>
    %cst_35 = arith.constant 0.000000e+00 : f32
    %61 = vector.broadcast %cst_35 : f32 to vector<16x128xf32>
    %62 = arith.cmpf ogt, %60, %61 : vector<16x128xf32>
    %cst_36 = arith.constant 0.000000e+00 : f32
    %63 = vector.broadcast %cst_36 : f32 to vector<16x128xf32>
    %64 = arith.minimumf %60, %63 : vector<16x128xf32>
    %65 = math.exp %64 : vector<16x128xf32>
    %cst_37 = arith.constant 1.000000e+00 : f32
    %66 = vector.broadcast %cst_37 : f32 to vector<16x128xf32>
    %67 = arith.subf %65, %66 : vector<16x128xf32>
    %68 = arith.select %62, %60, %67 : vector<16x128xi1>, vector<16x128xf32>
    %c2 = arith.constant 2 : index
    %c0_38 = arith.constant 0 : index
    %c0_39 = arith.constant 0 : index
    %69 = vector.load %arg6[%c2, %c0_38, %c0_39] : memref<4x16x128xf32, #tpu.memory_space<vmem>>, vector<1x16x128xf32>
    %70 = vector.shape_cast %69 : vector<1x16x128xf32> to vector<16x128xf32>
    %71 = vector.shape_cast %68 : vector<16x128xf32> to vector<1x16x128xf32>
    tpu.vector_store %arg6[%c2, %c0_38, %c0_39], %71 {strides = array<i32>} : memref<4x16x128xf32, #tpu.memory_space<vmem>>, vector<1x16x128xf32>,
    %c96 = arith.constant 96 : index
    %c0_40 = arith.constant 0 : index
    %72 = tpu.strided_load %arg7[%c96, %c0_40] {strides = array<i32: 2, 1>} : memref<128x128xf32, #tpu.memory_space<vmem>>, vector<16x128xf32>
    %c97 = arith.constant 97 : index
    %c0_41 = arith.constant 0 : index
    %73 = tpu.strided_load %arg7[%c97, %c0_41] {strides = array<i32: 2, 1>} : memref<128x128xf32, #tpu.memory_space<vmem>>, vector<16x128xf32>
    %74 = arith.maximumf %72, %73 : vector<16x128xf32>
    %cst_42 = arith.constant 0.000000e+00 : f32
    %75 = vector.broadcast %cst_42 : f32 to vector<16x128xf32>
    %76 = arith.cmpf ogt, %74, %75 : vector<16x128xf32>
    %cst_43 = arith.constant 0.000000e+00 : f32
    %77 = vector.broadcast %cst_43 : f32 to vector<16x128xf32>
    %78 = arith.minimumf %74, %77 : vector<16x128xf32>
    %79 = math.exp %78 : vector<16x128xf32>
    %cst_44 = arith.constant 1.000000e+00 : f32
    %80 = vector.broadcast %cst_44 : f32 to vector<16x128xf32>
    %81 = arith.subf %79, %80 : vector<16x128xf32>
    %82 = arith.select %76, %74, %81 : vector<16x128xi1>, vector<16x128xf32>
    %c3 = arith.constant 3 : index
    %c0_45 = arith.constant 0 : index
    %c0_46 = arith.constant 0 : index
    %83 = vector.load %arg6[%c3, %c0_45, %c0_46] : memref<4x16x128xf32, #tpu.memory_space<vmem>>, vector<1x16x128xf32>
    %84 = vector.shape_cast %83 : vector<1x16x128xf32> to vector<16x128xf32>
    %85 = vector.shape_cast %82 : vector<16x128xf32> to vector<1x16x128xf32>
    tpu.vector_store %arg6[%c3, %c0_45, %c0_46], %85 {strides = array<i32>} : memref<4x16x128xf32, #tpu.memory_space<vmem>>, vector<1x16x128xf32>,
    return
  }
  func.func @transform_0(%arg0: i32) -> (i32, i32) {
    %c0_i32 = arith.constant 0 : i32
    %c0_i32_0 = arith.constant 0 : i32
    %c0_i32_1 = arith.constant 0 : i32
    return %c0_i32, %c0_i32_0 : i32, i32
  }
  func.func @transform_1(%arg0: i32) -> (i32, i32) {
    %c0_i32 = arith.constant 0 : i32
    %c0_i32_0 = arith.constant 0 : i32
    %c0_i32_1 = arith.constant 0 : i32
    return %c0_i32, %c0_i32_0 : i32, i32
  }
  func.func @transform_2(%arg0: i32) -> (i32, i32) {
    %c0_i32 = arith.constant 0 : i32
    %c0_i32_0 = arith.constant 0 : i32
    %c0_i32_1 = arith.constant 0 : i32
    return %c0_i32, %c0_i32_0 : i32, i32
  }
  func.func @transform_3(%arg0: i32) -> (i32, i32) {
    %c0_i32 = arith.constant 0 : i32
    %c0_i32_0 = arith.constant 0 : i32
    %c0_i32_1 = arith.constant 0 : i32
    return %c0_i32, %c0_i32_0 : i32, i32
  }
  func.func @transform_4(%arg0: i32) -> (i32, i32) {
    %c0_i32 = arith.constant 0 : i32
    %c0_i32_0 = arith.constant 0 : i32
    %c0_i32_1 = arith.constant 0 : i32
    return %c0_i32, %c0_i32_0 : i32, i32
  }
  func.func @transform_5(%arg0: i32) -> (i32, i32, i32) {
    %c0_i32 = arith.constant 0 : i32
    %c0_i32_0 = arith.constant 0 : i32
    %c0_i32_1 = arith.constant 0 : i32
    %c0_i32_2 = arith.constant 0 : i32
    return %c0_i32, %c0_i32_0, %c0_i32_1 : i32, i32, i32
  }
}

</mosaic_0001>

<llo_original>
// kernel: downsample_layer.1
$region0: #{downsample_layer.1}
  #allocation0 [shape = 'u32[]', space=smem, size = 0x4, offset = 0x4, fixed_abs, tag = 'smem constant byte address 0x4 - core index']
  #allocation1 [shape = 'u32[144,128]{1,0:T(1,128)}', space=vmem, size = 0x12000, scoped, tag = 'internal scratch']
  #allocation2 [shape = 'f32[128,128]{1,0:T(8,128)}', space=vmem, size = 0x10000, scoped, tag = 'scratch operand']
  %s0 = inlined_call_operand.vmem [shape: bf16[128,384], index: 0, kind: input, shape index: {}]
  %s1 = inlined_call_operand.vmem [shape: bf16[384,128], index: 1, kind: input, shape index: {}]
  %s2 = inlined_call_operand.vmem [shape: f32[1,128], index: 2, kind: input, shape index: {}]
  %s3 = inlined_call_operand.vmem [shape: f32[1,128], index: 3, kind: input, shape index: {}]
  %s4 = inlined_call_operand.vmem [shape: f32[1,128], index: 4, kind: input, shape index: {}]
  %s5 = inlined_call_operand.hbm [shape: f32[4,16,128], index: 5, kind: output, shape index: {}]
  %s6 = sld [smem:[#allocation0]]
  $region30: #{downsample_layer.1} parent=0
    _
  %s8 = ssub.s32 1, %s6
  %s9 = scalar_select 0, %s8, %s6
  $region1: #{downsample_layer.1} parent=0
    #allocation3 [shape = 'u8[32768]{0}', space=vmem, size = 0x8000, scoped, tag = 'output window, operand 0, single buffered']
    #allocation4 [shape = 's32[1]{0}', space=sflag, size = 0x4, scoped, tag = 'scoped memory for downsample_layer.1']
    %10 = vsyncpa [#allocation4], 0
    // Predicated region
    $region2: #{downsample_layer.1} parent=1 // pred_check
      _
    $region3: #{downsample_layer.1} parent=1 // pred_check_branch
      %12 = sbr.rel (0) target = $region5
    $region4: #{downsample_layer.1} parent=1 // pred_region
      _
    $region5: #{downsample_layer.1} parent=1 // pred_fallthru
      _
    // Predicated region
    $region6: #{downsample_layer.1} parent=1 // pred_check
      _
    $region7: #{downsample_layer.1} parent=1 // pred_check_branch
      %14 = sbr.rel (0) target = $region9
    $region8: #{downsample_layer.1} parent=1 // pred_region
      _
    $region9: #{downsample_layer.1} parent=1 // pred_fallthru
      _
    // Predicated region
    $region10: #{downsample_layer.1} parent=1 // pred_check
      _
    $region11: #{downsample_layer.1} parent=1 // pred_check_branch
      %16 = sbr.rel (0) target = $region13
    $region12: #{downsample_layer.1} parent=1 // pred_region
      _
    $region13: #{downsample_layer.1} parent=1 // pred_fallthru
      _
    // Predicated region
    $region14: #{downsample_layer.1} parent=1 // pred_check
      _
    $region15: #{downsample_layer.1} parent=1 // pred_check_branch
      %18 = sbr.rel (0) target = $region17
    $region16: #{downsample_layer.1} parent=1 // pred_region
      _
    $region17: #{downsample_layer.1} parent=1 // pred_fallthru
      _
    // Predicated region
    $region18: #{downsample_layer.1} parent=1 // pred_check
      _
    $region19: #{downsample_layer.1} parent=1 // pred_check_branch
      %20 = sbr.rel (0) target = $region21
    $region20: #{downsample_layer.1} parent=1 // pred_region
      _
    $region21: #{downsample_layer.1} parent=1 // pred_fallthru
      _
    %v22 = vld [vmem:[%s0] sm:$0xff]
    %v23 = vld [vmem:[%s0 + $0x8] sm:$0xf]
    %v24 = vld [vmem:[%s0 + $0xc] sm:$0xff]
    %v25 = vld [vmem:[%s0 + $0x14] sm:$0xf]
    %v26 = vld [vmem:[%s0 + $0x18] sm:$0xff]
    %v27 = vld [vmem:[%s0 + $0x20] sm:$0xf]
    %v28 = vld [vmem:[%s0 + $0x24] sm:$0xff]
    %v29 = vld [vmem:[%s0 + $0x2c] sm:$0xf]
    %v30 = vld [vmem:[%s0 + $0x30] sm:$0xff]
    %v31 = vld [vmem:[%s0 + $0x38] sm:$0xf]
    %v32 = vld [vmem:[%s0 + $0x3c] sm:$0xff]
    %v33 = vld [vmem:[%s0 + $0x44] sm:$0xf]
    %v34 = vld [vmem:[%s0 + $0x48] sm:$0xff]
    %v35 = vld [vmem:[%s0 + $0x50] sm:$0xf]
    %v36 = vld [vmem:[%s0 + $0x54] sm:$0xff]
    %v37 = vld [vmem:[%s0 + $0x5c] sm:$0xf]
    %v38 = vld [vmem:[%s0 + $0x60] sm:$0xff]
    %v39 = vld [vmem:[%s0 + $0x68] sm:$0xf]
    %v40 = vld [vmem:[%s0 + $0x6c] sm:$0xff]
    %v41 = vld [vmem:[%s0 + $0x74] sm:$0xf]
    %v42 = vld [vmem:[%s0 + $0x78] sm:$0xff]
    %v43 = vld [vmem:[%s0 + $0x80] sm:$0xf]
    %v44 = vld [vmem:[%s0 + $0x84] sm:$0xff]
    %v45 = vld [vmem:[%s0 + $0x8c] sm:$0xf]
    %v46 = vld [vmem:[%s0 + $0x90] sm:$0xff]
    %v47 = vld [vmem:[%s0 + $0x98] sm:$0xf]
    %v48 = vld [vmem:[%s0 + $0x9c] sm:$0xff]
    %v49 = vld [vmem:[%s0 + $0xa4] sm:$0xf]
    %v50 = vld [vmem:[%s0 + $0xa8] sm:$0xff]
    %v51 = vld [vmem:[%s0 + $0xb0] sm:$0xf]
    %v52 = vld [vmem:[%s0 + $0xb4] sm:$0xff]
    %v53 = vld [vmem:[%s0 + $0xbc] sm:$0xf]
    %v54 = vld [vmem:[%s1] sm:$0xf]
    %v55 = vld [vmem:[%s1 + $0x4] sm:$0xf]
    %v56 = vld [vmem:[%s1 + $0x8] sm:$0xf]
    %v57 = vld [vmem:[%s1 + $0xc] sm:$0xf]
    %v58 = vld [vmem:[%s1 + $0x10] sm:$0xf]
    %v59 = vld [vmem:[%s1 + $0x14] sm:$0xf]
    %v60 = vld [vmem:[%s1 + $0x18] sm:$0xf]
    %v61 = vld [vmem:[%s1 + $0x1c] sm:$0xf]
    %v62 = vld [vmem:[%s1 + $0x20] sm:$0xf]
    %v63 = vld [vmem:[%s1 + $0x24] sm:$0xf]
    %v64 = vld [vmem:[%s1 + $0x28] sm:$0xf]
    %v65 = vld [vmem:[%s1 + $0x2c] sm:$0xf]
    %v66 = vld [vmem:[%s1 + $0x30] sm:$0xf]
    %v67 = vld [vmem:[%s1 + $0x34] sm:$0xf]
    %v68 = vld [vmem:[%s1 + $0x38] sm:$0xf]
    %v69 = vld [vmem:[%s1 + $0x3c] sm:$0xf]
    %v70 = vld [vmem:[%s1 + $0x40] sm:$0xf]
    %v71 = vld [vmem:[%s1 + $0x44] sm:$0xf]
    %v72 = vld [vmem:[%s1 + $0x48] sm:$0xf]
    %v73 = vld [vmem:[%s1 + $0x4c] sm:$0xf]
    %v74 = vld [vmem:[%s1 + $0x50] sm:$0xf]
    %v75 = vld [vmem:[%s1 + $0x54] sm:$0xf]
    %v76 = vld [vmem:[%s1 + $0x58] sm:$0xf]
    %v77 = vld [vmem:[%s1 + $0x5c] sm:$0xf]
    %v78 = vld [vmem:[%s1 + $0x60] sm:$0xf]
    %v79 = vld [vmem:[%s1 + $0x64] sm:$0xf]
    %v80 = vld [vmem:[%s1 + $0x68] sm:$0xf]
    %v81 = vld [vmem:[%s1 + $0x6c] sm:$0xf]
    %v82 = vld [vmem:[%s1 + $0x70] sm:$0xf]
    %v83 = vld [vmem:[%s1 + $0x74] sm:$0xf]
    %v84 = vld [vmem:[%s1 + $0x78] sm:$0xf]
    %v85 = vld [vmem:[%s1 + $0x7c] sm:$0xf]
    %v86 = vld [vmem:[%s1 + $0x80] sm:$0xf]
    %v87 = vld [vmem:[%s1 + $0x84] sm:$0xf]
    %v88 = vld [vmem:[%s1 + $0x88] sm:$0xf]
    %v89 = vld [vmem:[%s1 + $0x8c] sm:$0xf]
    %v90 = vld [vmem:[%s1 + $0x90] sm:$0xf]
    %v91 = vld [vmem:[%s1 + $0x94] sm:$0xf]
    %v92 = vld [vmem:[%s1 + $0x98] sm:$0xf]
    %v93 = vld [vmem:[%s1 + $0x9c] sm:$0xf]
    %v94 = vld [vmem:[%s1 + $0xa0] sm:$0xf]
    %v95 = vld [vmem:[%s1 + $0xa4] sm:$0xf]
    %v96 = vld [vmem:[%s1 + $0xa8] sm:$0xf]
    %v97 = vld [vmem:[%s1 + $0xac] sm:$0xf]
    %v98 = vld [vmem:[%s1 + $0xb0] sm:$0xf]
    %v99 = vld [vmem:[%s1 + $0xb4] sm:$0xf]
    %v100 = vld [vmem:[%s1 + $0xb8] sm:$0xf]
    %v101 = vld [vmem:[%s1 + $0xbc] sm:$0xf]
    %v102 = vld [vmem:[%s2] sm:$0x1]
    %v104 = vlaneseq
    %v105 = vshrl.u32 %v104, 7
    %v106 = vsub.s32 0, %v105
    %v107 = vrot.slane %v102, %v106
    %v141 = vunpack.c.l.b16 %v22
    %v142 = vunpack.c.h.b16 %v22
    %v143 = vunpack.c.l.b16 %v23
    %v144 = vunpack.c.l.b16 %v24
    %v145 = vunpack.c.h.b16 %v24
    %v146 = vunpack.c.l.b16 %v25
    %v147 = vunpack.c.l.b16 %v26
    %v148 = vunpack.c.h.b16 %v26
    %v149 = vunpack.c.l.b16 %v27
    %v150 = vunpack.c.l.b16 %v28
    %v151 = vunpack.c.h.b16 %v28
    %v152 = vunpack.c.l.b16 %v29
    %v153 = vunpack.c.l.b16 %v30
    %v154 = vunpack.c.h.b16 %v30
    %v155 = vunpack.c.l.b16 %v31
    %v156 = vunpack.c.l.b16 %v32
    %v157 = vunpack.c.h.b16 %v32
    %v158 = vunpack.c.l.b16 %v33
    %v159 = vunpack.c.l.b16 %v34
    %v160 = vunpack.c.h.b16 %v34
    %v161 = vunpack.c.l.b16 %v35
    %v162 = vunpack.c.l.b16 %v36
    %v163 = vunpack.c.h.b16 %v36
    %v164 = vunpack.c.l.b16 %v37
    %v165 = vunpack.c.l.b16 %v38
    %v166 = vunpack.c.h.b16 %v38
    %v167 = vunpack.c.l.b16 %v39
    %v168 = vunpack.c.l.b16 %v40
    %v169 = vunpack.c.h.b16 %v40
    %v170 = vunpack.c.l.b16 %v41
    %v171 = vunpack.c.l.b16 %v42
    %v172 = vunpack.c.h.b16 %v42
    %v173 = vunpack.c.l.b16 %v43
    %v174 = vunpack.c.l.b16 %v44
    %v175 = vunpack.c.h.b16 %v44
    %v176 = vunpack.c.l.b16 %v45
    %v177 = vunpack.c.l.b16 %v46
    %v178 = vunpack.c.h.b16 %v46
    %v179 = vunpack.c.l.b16 %v47
    %v180 = vunpack.c.l.b16 %v48
    %v181 = vunpack.c.h.b16 %v48
    %v182 = vunpack.c.l.b16 %v49
    %v183 = vunpack.c.l.b16 %v50
    %v184 = vunpack.c.h.b16 %v50
    %v185 = vunpack.c.l.b16 %v51
    %v186 = vunpack.c.l.b16 %v52
    %v187 = vunpack.c.h.b16 %v52
    %v188 = vunpack.c.l.b16 %v53
    %v189 = vpack.c.b16 %v144, %v141
    %v190 = vpack.c.b16 %v145, %v142
    %v191 = vpack.c.b16 %v146, %v143
    %v192 = vpack.c.b16 %v150, %v147
    %v193 = vpack.c.b16 %v151, %v148
    %v194 = vpack.c.b16 %v152, %v149
    %v195 = vpack.c.b16 %v156, %v153
    %v196 = vpack.c.b16 %v157, %v154
    %v197 = vpack.c.b16 %v158, %v155
    %v198 = vpack.c.b16 %v162, %v159
    %v199 = vpack.c.b16 %v163, %v160
    %v200 = vpack.c.b16 %v164, %v161
    %v201 = vpack.c.b16 %v168, %v165
    %v202 = vpack.c.b16 %v169, %v166
    %v203 = vpack.c.b16 %v170, %v167
    %v204 = vpack.c.b16 %v174, %v171
    %v205 = vpack.c.b16 %v175, %v172
    %v206 = vpack.c.b16 %v176, %v173
    %v207 = vpack.c.b16 %v180, %v177
    %v208 = vpack.c.b16 %v181, %v178
    %v209 = vpack.c.b16 %v182, %v179
    %v210 = vpack.c.b16 %v186, %v183
    %v211 = vpack.c.b16 %v187, %v184
    %v212 = vpack.c.b16 %v188, %v185
    %v285 = vunpack.c.l.b16 %v54
    %v286 = vunpack.c.l.b16 %v55
    %v287 = vunpack.c.l.b16 %v56
    %v288 = vunpack.c.l.b16 %v57
    %v289 = vunpack.c.l.b16 %v58
    %v290 = vunpack.c.l.b16 %v59
    %v291 = vunpack.c.l.b16 %v60
    %v292 = vunpack.c.l.b16 %v61
    %v293 = vunpack.c.l.b16 %v62
    %v294 = vunpack.c.l.b16 %v63
    %v295 = vunpack.c.l.b16 %v64
    %v296 = vunpack.c.l.b16 %v65
    %v297 = vunpack.c.l.b16 %v66
    %v298 = vunpack.c.l.b16 %v67
    %v299 = vunpack.c.l.b16 %v68
    %v300 = vunpack.c.l.b16 %v69
    %v301 = vunpack.c.l.b16 %v70
    %v302 = vunpack.c.l.b16 %v71
    %v303 = vunpack.c.l.b16 %v72
    %v304 = vunpack.c.l.b16 %v73
    %v305 = vunpack.c.l.b16 %v74
    %v306 = vunpack.c.l.b16 %v75
    %v307 = vunpack.c.l.b16 %v76
    %v308 = vunpack.c.l.b16 %v77
    %v309 = vunpack.c.l.b16 %v78
    %v310 = vunpack.c.l.b16 %v79
    %v311 = vunpack.c.l.b16 %v80
    %v312 = vunpack.c.l.b16 %v81
    %v313 = vunpack.c.l.b16 %v82
    %v314 = vunpack.c.l.b16 %v83
    %v315 = vunpack.c.l.b16 %v84
    %v316 = vunpack.c.l.b16 %v85
    %v317 = vunpack.c.l.b16 %v86
    %v318 = vunpack.c.l.b16 %v87
    %v319 = vunpack.c.l.b16 %v88
    %v320 = vunpack.c.l.b16 %v89
    %v321 = vunpack.c.l.b16 %v90
    %v322 = vunpack.c.l.b16 %v91
    %v323 = vunpack.c.l.b16 %v92
    %v324 = vunpack.c.l.b16 %v93
    %v325 = vunpack.c.l.b16 %v94
    %v326 = vunpack.c.l.b16 %v95
    %v327 = vunpack.c.l.b16 %v96
    %v328 = vunpack.c.l.b16 %v97
    %v329 = vunpack.c.l.b16 %v98
    %v330 = vunpack.c.l.b16 %v99
    %v331 = vunpack.c.l.b16 %v100
    %v332 = vunpack.c.l.b16 %v101
    %v333 = vpack.c.b16 %v286, %v285
    %v334 = vpack.c.b16 %v288, %v287
    %v335 = vpack.c.b16 %v290, %v289
    %v336 = vpack.c.b16 %v292, %v291
    %v337 = vpack.c.b16 %v294, %v293
    %v338 = vpack.c.b16 %v296, %v295
    %v339 = vpack.c.b16 %v298, %v297
    %v340 = vpack.c.b16 %v300, %v299
    %v341 = vpack.c.b16 %v302, %v301
    %v342 = vpack.c.b16 %v304, %v303
    %v343 = vpack.c.b16 %v306, %v305
    %v344 = vpack.c.b16 %v308, %v307
    %v345 = vpack.c.b16 %v310, %v309
    %v346 = vpack.c.b16 %v312, %v311
    %v347 = vpack.c.b16 %v314, %v313
    %v348 = vpack.c.b16 %v316, %v315
    %v349 = vpack.c.b16 %v318, %v317
    %v350 = vpack.c.b16 %v320, %v319
    %v351 = vpack.c.b16 %v322, %v321
    %v352 = vpack.c.b16 %v324, %v323
    %v353 = vpack.c.b16 %v326, %v325
    %v354 = vpack.c.b16 %v328, %v327
    %v355 = vpack.c.b16 %v330, %v329
    %v356 = vpack.c.b16 %v332, %v331
    %381 = vmatprep.subr.bf16.mxu0 0
    %382 = vmatpush1.bf16.msra.mxu0 %v340
    %383 = vmatprep.subr.bf16.mxu0 0
    %384 = vmatpush1.bf16.msra.mxu0 %v339
    %385 = vmatprep.subr.bf16.mxu0 0
    %386 = vmatpush1.bf16.msra.mxu0 %v338
    %387 = vmatprep.subr.bf16.mxu0 0
    %388 = vmatpush1.bf16.msra.mxu0 %v337
    %389 = vmatprep.subr.bf16.mxu0 0
    %390 = vmatpush1.bf16.msra.mxu0 %v336
    %391 = vmatprep.subr.bf16.mxu0 0
    %392 = vmatpush1.bf16.msra.mxu0 %v335
    %393 = vmatprep.subr.bf16.mxu0 0
    %394 = vmatpush1.bf16.msra.mxu0 %v334
    %395 = vmatprep.subr.bf16.mxu0 0
    %396 = vmatpush1.bf16.msra.mxu0 %v333
    %397 = vmatprep.subr.bf16.mxu0 0
    %398 = vmatpush2.bf16.msra.mxu0 %v348
    %399 = vmatprep.subr.bf16.mxu0 0
    %400 = vmatpush2.bf16.msra.mxu0 %v347
    %401 = vmatprep.subr.bf16.mxu0 0
    %402 = vmatpush2.bf16.msra.mxu0 %v346
    %403 = vmatprep.subr.bf16.mxu0 0
    %404 = vmatpush2.bf16.msra.mxu0 %v345
    %405 = vmatprep.subr.bf16.mxu0 0
    %406 = vmatpush2.bf16.msra.mxu0 %v344
    %407 = vmatprep.subr.bf16.mxu0 0
    %408 = vmatpush2.bf16.msra.mxu0 %v343
    %409 = vmatprep.subr.bf16.mxu0 0
    %410 = vmatpush2.bf16.msra.mxu0 %v342
    %411 = vmatprep.subr.bf16.mxu0 0
    %412 = vmatpush2.bf16.msra.mxu0 %v341
    %413 = vmatprep.mubr.bf16.mxu0 %v190
    %414 = vmatmul.mubr.bf16.gmra.mxu0 %v189
    %v415 = vpop.f32.mrf.mxu0
    %v416 = vadd.f32 %v107, %v415
    %v417 = vpop.f32.mrf.mxu0
    %v418 = vpop.f32.mrf.mxu0
    %v419 = vadd.f32 %v107, %v418
    %v420 = vpop.f32.mrf.mxu0
    %421 = vmatprep.mubr.bf16.mxu0 %v193
    %422 = vmatmul.mubr.bf16.gmra.mxu0 %v192
    %v423 = vpop.f32.mrf.mxu0
    %v424 = vadd.f32 %v107, %v423
    %v425 = vpop.f32.mrf.mxu0
    %v426 = vpop.f32.mrf.mxu0
    %v427 = vadd.f32 %v107, %v426
    %v428 = vpop.f32.mrf.mxu0
    %429 = vmatprep.mubr.bf16.mxu0 %v196
    %430 = vmatmul.mubr.bf16.gmra.mxu0 %v195
    %v431 = vpop.f32.mrf.mxu0
    %v432 = vadd.f32 %v107, %v431
    %v433 = vpop.f32.mrf.mxu0
    %v434 = vpop.f32.mrf.mxu0
    %v435 = vadd.f32 %v107, %v434
    %v436 = vpop.f32.mrf.mxu0
    %437 = vmatprep.mubr.bf16.mxu0 %v199
    %438 = vmatmul.mubr.bf16.gmra.mxu0 %v198
    %v439 = vpop.f32.mrf.mxu0
    %v440 = vadd.f32 %v107, %v439
    %v441 = vpop.f32.mrf.mxu0
    %v442 = vpop.f32.mrf.mxu0
    %v443 = vadd.f32 %v107, %v442
    %v444 = vpop.f32.mrf.mxu0
    %445 = vmatprep.mubr.bf16.mxu0 %v202
    %446 = vmatmul.mubr.bf16.gmra.mxu0 %v201
    %v447 = vpop.f32.mrf.mxu0
    %v448 = vadd.f32 %v107, %v447
    %v449 = vpop.f32.mrf.mxu0
    %v450 = vpop.f32.mrf.mxu0
    %v451 = vadd.f32 %v107, %v450
    %v452 = vpop.f32.mrf.mxu0
    %453 = vmatprep.mubr.bf16.mxu0 %v205
    %454 = vmatmul.mubr.bf16.gmra.mxu0 %v204
    %v455 = vpop.f32.mrf.mxu0
    %v456 = vadd.f32 %v107, %v455
    %v457 = vpop.f32.mrf.mxu0
    %v458 = vpop.f32.mrf.mxu0
    %v459 = vadd.f32 %v107, %v458
    %v460 = vpop.f32.mrf.mxu0
    %461 = vmatprep.mubr.bf16.mxu0 %v208
    %462 = vmatmul.mubr.bf16.gmra.mxu0 %v207
    %v463 = vpop.f32.mrf.mxu0
    %v464 = vadd.f32 %v107, %v463
    %v465 = vpop.f32.mrf.mxu0
    %v466 = vpop.f32.mrf.mxu0
    %v467 = vadd.f32 %v107, %v466
    %v468 = vpop.f32.mrf.mxu0
    %469 = vmatprep.mubr.bf16.mxu0 %v211
    %470 = vmatmul.mubr.bf16.gmra.mxu0 %v210
    %v471 = vpop.f32.mrf.mxu0
    %v472 = vadd.f32 %v107, %v471
    %v473 = vpop.f32.mrf.mxu0
    %v474 = vpop.f32.mrf.mxu0
    %v475 = vadd.f32 %v107, %v474
    %v476 = vpop.f32.mrf.mxu0
    %477 = vdwg.mxu0
    %478 = vmatprep.subr.bf16.mxu0 0
    %479 = vmatpush1.bf16.msra.mxu0 %v356
    %480 = vmatprep.subr.bf16.mxu0 0
    %481 = vmatpush1.bf16.msra.mxu0 %v355
    %482 = vmatprep.subr.bf16.mxu0 0
    %483 = vmatpush1.bf16.msra.mxu0 %v354
    %484 = vmatprep.subr.bf16.mxu0 0
    %485 = vmatpush1.bf16.msra.mxu0 %v353
    %486 = vmatprep.subr.bf16.mxu0 0
    %487 = vmatpush1.bf16.msra.mxu0 %v352
    %488 = vmatprep.subr.bf16.mxu0 0
    %489 = vmatpush1.bf16.msra.mxu0 %v351
    %490 = vmatprep.subr.bf16.mxu0 0
    %491 = vmatpush1.bf16.msra.mxu0 %v350
    %492 = vmatprep.subr.bf16.mxu0 0
    %493 = vmatpush1.bf16.msra.mxu0 %v349
    %494 = vmatprep.subr.bf16.mxu0 0
    %495 = vmatpush2.bf16.msra.mxu0 0
    %496 = vmatprep.subr.bf16.mxu0 0
    %497 = vmatpush2.bf16.msra.mxu0 0
    %498 = vmatprep.subr.bf16.mxu0 0
    %499 = vmatpush2.bf16.msra.mxu0 0
    %500 = vmatprep.subr.bf16.mxu0 0
    %501 = vmatpush2.bf16.msra.mxu0 0
    %502 = vmatprep.subr.bf16.mxu0 0
    %503 = vmatpush2.bf16.msra.mxu0 0
    %504 = vmatprep.subr.bf16.mxu0 0
    %505 = vmatpush2.bf16.msra.mxu0 0
    %506 = vmatprep.subr.bf16.mxu0 0
    %507 = vmatpush2.bf16.msra.mxu0 0
    %508 = vmatprep.subr.bf16.mxu0 0
    %509 = vmatpush2.bf16.msra.mxu0 0
    %510 = vmatprep.mubr.bf16.mxu0 0
    %511 = vmatmul.mubr.bf16.gmra.mxu0 %v191
    %v512 = vpop.f32.mrf.mxu0
    %v513 = vadd.f32 %v416, %v512
    %v514 = vpop.f32.mrf.mxu0
    %v515 = vpop.f32.mrf.mxu0
    %v516 = vadd.f32 %v419, %v515
    %v517 = vpop.f32.mrf.mxu0
    %518 = vmatprep.mubr.bf16.mxu0 0
    %519 = vmatmul.mubr.bf16.gmra.mxu0 %v194
    %v520 = vpop.f32.mrf.mxu0
    %v521 = vadd.f32 %v424, %v520
    %v522 = vpop.f32.mrf.mxu0
    %v523 = vpop.f32.mrf.mxu0
    %v524 = vadd.f32 %v427, %v523
    %v525 = vpop.f32.mrf.mxu0
    %526 = vmatprep.mubr.bf16.mxu0 0
    %527 = vmatmul.mubr.bf16.gmra.mxu0 %v197
    %v528 = vpop.f32.mrf.mxu0
    %v529 = vadd.f32 %v432, %v528
    %v530 = vpop.f32.mrf.mxu0
    %v531 = vpop.f32.mrf.mxu0
    %v532 = vadd.f32 %v435, %v531
    %v533 = vpop.f32.mrf.mxu0
    %534 = vmatprep.mubr.bf16.mxu0 0
    %535 = vmatmul.mubr.bf16.gmra.mxu0 %v200
    %v536 = vpop.f32.mrf.mxu0
    %v537 = vadd.f32 %v440, %v536
    %v538 = vpop.f32.mrf.mxu0
    %v539 = vpop.f32.mrf.mxu0
    %v540 = vadd.f32 %v443, %v539
    %v541 = vpop.f32.mrf.mxu0
    %542 = vmatprep.mubr.bf16.mxu0 0
    %543 = vmatmul.mubr.bf16.gmra.mxu0 %v203
    %v544 = vpop.f32.mrf.mxu0
    %v545 = vadd.f32 %v448, %v544
    %v546 = vpop.f32.mrf.mxu0
    %v547 = vpop.f32.mrf.mxu0
    %v548 = vadd.f32 %v451, %v547
    %v549 = vpop.f32.mrf.mxu0
    %550 = vmatprep.mubr.bf16.mxu0 0
    %551 = vmatmul.mubr.bf16.gmra.mxu0 %v206
    %v552 = vpop.f32.mrf.mxu0
    %v553 = vadd.f32 %v456, %v552
    %v554 = vpop.f32.mrf.mxu0
    %v555 = vpop.f32.mrf.mxu0
    %v556 = vadd.f32 %v459, %v555
    %v557 = vpop.f32.mrf.mxu0
    %558 = vmatprep.mubr.bf16.mxu0 0
    %559 = vmatmul.mubr.bf16.gmra.mxu0 %v209
    %v560 = vpop.f32.mrf.mxu0
    %v561 = vadd.f32 %v464, %v560
    %v562 = vpop.f32.mrf.mxu0
    %v563 = vpop.f32.mrf.mxu0
    %v564 = vadd.f32 %v467, %v563
    %v565 = vpop.f32.mrf.mxu0
    %566 = vmatprep.mubr.bf16.mxu0 0
    %567 = vmatmul.mubr.bf16.gmra.mxu0 %v212
    %v568 = vpop.f32.mrf.mxu0
    %v569 = vadd.f32 %v472, %v568
    %v570 = vpop.f32.mrf.mxu0
    %v571 = vpop.f32.mrf.mxu0
    %v572 = vadd.f32 %v475, %v571
    %v573 = vpop.f32.mrf.mxu0
    %574 = vdwg.mxu0
    %v575 = vadd.f32 %v513, %v516
    %v576 = vadd.f32 %v575, %v521
    %v577 = vadd.f32 %v576, %v524
    %v578 = vadd.f32 %v577, %v529
    %v579 = vadd.f32 %v578, %v532
    %v580 = vadd.f32 %v579, %v537
    %v581 = vadd.f32 %v580, %v540
    %v582 = vadd.f32 %v581, %v545
    %v583 = vadd.f32 %v582, %v548
    %v584 = vadd.f32 %v583, %v553
    %v585 = vadd.f32 %v584, %v556
    %v586 = vadd.f32 %v585, %v561
    %v587 = vadd.f32 %v586, %v564
    %v588 = vadd.f32 %v587, %v569
    %v589 = vadd.f32 %v588, %v572
    %v590 = vrot.slane %v589, 4
    %v591 = vadd.f32 %v589, %v590
    %v592 = vrot.slane %v591, 2
    %v593 = vadd.f32 %v591, %v592
    %v594 = vrot.slane %v593, 1
    %v595 = vadd.f32 %v593, %v594
    %v596 = vrcp.pop 128.0
    %v597 = vmul.f32 %v595, %v596
    %v598 = vsub.f32 %v513, %v597
    %v599 = vsub.f32 %v516, %v597
    %v600 = vsub.f32 %v521, %v597
    %v601 = vsub.f32 %v524, %v597
    %v602 = vsub.f32 %v529, %v597
    %v603 = vsub.f32 %v532, %v597
    %v604 = vsub.f32 %v537, %v597
    %v605 = vsub.f32 %v540, %v597
    %v606 = vsub.f32 %v545, %v597
    %v607 = vsub.f32 %v548, %v597
    %v608 = vsub.f32 %v553, %v597
    %v609 = vsub.f32 %v556, %v597
    %v610 = vsub.f32 %v561, %v597
    %v611 = vsub.f32 %v564, %v597
    %v612 = vsub.f32 %v569, %v597
    %v613 = vsub.f32 %v572, %v597
    %v614 = vmul.f32 %v598, %v598
    %v615 = vmul.f32 %v599, %v599
    %v616 = vmul.f32 %v600, %v600
    %v617 = vmul.f32 %v601, %v601
    %v618 = vmul.f32 %v602, %v602
    %v619 = vmul.f32 %v603, %v603
    %v620 = vmul.f32 %v604, %v604
    %v621 = vmul.f32 %v605, %v605
    %v622 = vmul.f32 %v606, %v606
    %v623 = vmul.f32 %v607, %v607
    %v624 = vmul.f32 %v608, %v608
    %v625 = vmul.f32 %v609, %v609
    %v626 = vmul.f32 %v610, %v610
    %v627 = vmul.f32 %v611, %v611
    %v628 = vmul.f32 %v612, %v612
    %v629 = vmul.f32 %v613, %v613
    %v630 = vadd.f32 %v614, %v615
    %v631 = vadd.f32 %v630, %v616
    %v632 = vadd.f32 %v631, %v617
    %v633 = vadd.f32 %v632, %v618
    %v634 = vadd.f32 %v633, %v619
    %v635 = vadd.f32 %v634, %v620
    %v636 = vadd.f32 %v635, %v621
    %v637 = vadd.f32 %v636, %v622
    %v638 = vadd.f32 %v637, %v623
    %v639 = vadd.f32 %v638, %v624
    %v640 = vadd.f32 %v639, %v625
    %v641 = vadd.f32 %v640, %v626
    %v642 = vadd.f32 %v641, %v627
    %v643 = vadd.f32 %v642, %v628
    %v644 = vadd.f32 %v643, %v629
    %v645 = vrot.slane %v644, 4
    %v646 = vadd.f32 %v644, %v645
    %v647 = vrot.slane %v646, 2
    %v648 = vadd.f32 %v646, %v647
    %v649 = vrot.slane %v648, 1
    %v650 = vadd.f32 %v648, %v649
    %v651 = vmul.f32 %v650, %v596
    %v652 = vld [vmem:[%s3] sm:$0x1]
    %v653 = vadd.f32 %v651, 1e-05
    %v654 = vrsqrt.pop %v653
    %v655 = vmul.f32 %v652, %v654
    %v656 = vld [vmem:[%s4] sm:$0x1]
    %v657 = vmul.f32 %v597, %v655
    %v658 = vsub.f32 %v656, %v657
    %v660 = vlaneseq
    %v661 = vshrl.u32 %v660, 7
    %v662 = vsub.s32 0, %v661
    %v663 = vrot.slane %v655, %v662
    %v665 = vmul.f32 %v513, %v663
    %v666 = vmul.f32 %v516, %v663
    %v667 = vmul.f32 %v521, %v663
    %v668 = vmul.f32 %v524, %v663
    %v669 = vmul.f32 %v529, %v663
    %v670 = vmul.f32 %v532, %v663
    %v671 = vmul.f32 %v537, %v663
    %v672 = vmul.f32 %v540, %v663
    %v673 = vmul.f32 %v545, %v663
    %v674 = vmul.f32 %v548, %v663
    %v675 = vmul.f32 %v553, %v663
    %v676 = vmul.f32 %v556, %v663
    %v677 = vmul.f32 %v561, %v663
    %v678 = vmul.f32 %v564, %v663
    %v679 = vmul.f32 %v569, %v663
    %v680 = vmul.f32 %v572, %v663
    %v682 = vlaneseq
    %v683 = vshrl.u32 %v682, 7
    %v684 = vsub.s32 0, %v683
    %v685 = vrot.slane %v658, %v684
    %v687 = vadd.f32 %v665, %v685
    %v688 = vadd.f32 %v666, %v685
    %v689 = vadd.f32 %v667, %v685
    %v690 = vadd.f32 %v668, %v685
    %v691 = vadd.f32 %v669, %v685
    %v692 = vadd.f32 %v670, %v685
    %v693 = vadd.f32 %v671, %v685
    %v694 = vadd.f32 %v672, %v685
    %v695 = vadd.f32 %v673, %v685
    %v696 = vadd.f32 %v674, %v685
    %v697 = vadd.f32 %v675, %v685
    %v698 = vadd.f32 %v676, %v685
    %v699 = vadd.f32 %v677, %v685
    %v700 = vadd.f32 %v678, %v685
    %v701 = vadd.f32 %v679, %v685
    %v702 = vadd.f32 %v680, %v685
    %703 = vst [vmem:[#allocation2] sm:$0xff] %v687
    %704 = vst [vmem:[#allocation2 + $0x8] sm:$0xff] %v688
    %705 = vst [vmem:[#allocation2 + $0x10] sm:$0xff] %v689
    %706 = vst [vmem:[#allocation2 + $0x18] sm:$0xff] %v690
    %707 = vst [vmem:[#allocation2 + $0x20] sm:$0xff] %v691
    %708 = vst [vmem:[#allocation2 + $0x28] sm:$0xff] %v692
    %709 = vst [vmem:[#allocation2 + $0x30] sm:$0xff] %v693
    %710 = vst [vmem:[#allocation2 + $0x38] sm:$0xff] %v694
    %711 = vst [vmem:[#allocation2 + $0x40] sm:$0xff] %v695
    %712 = vst [vmem:[#allocation2 + $0x48] sm:$0xff] %v696
    %713 = vst [vmem:[#allocation2 + $0x50] sm:$0xff] %v697
    %714 = vst [vmem:[#allocation2 + $0x58] sm:$0xff] %v698
    %715 = vst [vmem:[#allocation2 + $0x60] sm:$0xff] %v699
    %716 = vst [vmem:[#allocation2 + $0x68] sm:$0xff] %v700
    %717 = vst [vmem:[#allocation2 + $0x70] sm:$0xff] %v701
    %718 = vst [vmem:[#allocation2 + $0x78] sm:$0xff] %v702
    %v719 = vld [vmem:[#allocation2] ss:$2 sm:$0xff]
    %s720 = scalar_lea.vmem [#allocation2], 16
    %v721 = vld [vmem:[%s720] ss:$2 sm:$0xff]
    %s722 = scalar_lea.vmem [#allocation2], 1
    %v723 = vld [vmem:[%s722] ss:$2 sm:$0xff]
    %s724 = scalar_lea.vmem [#allocation2], 17
    %v725 = vld [vmem:[%s724] ss:$2 sm:$0xff]
    %v726 = vmax.f32 %v719, %v723
    %v727 = vmax.f32 %v721, %v725
    %vm728 = vcmp.gt.f32.partialorder %v726, 0.0
    %vm729 = vcmp.gt.f32.partialorder %v727, 0.0
    %v730 = vmin.f32 %v726, 0.0
    %v731 = vmin.f32 %v727, 0.0
    %v732 = vmul.f32 %v730, 1.442695
    %v733 = vpow.pop %v732
    %v734 = vmul.f32 %v731, 1.442695
    %v735 = vpow.pop %v734
    %v736 = vsub.f32 %v733, 1.0
    %v737 = vsub.f32 %v735, 1.0
    %v738 = vsel %vm728, %v726, %v736
    %v739 = vsel %vm729, %v727, %v737
    %740 = vst [vmem:[#allocation3] sm:$0xff] %v738
    %741 = vst [vmem:[#allocation3 + $0x8] sm:$0xff] %v739
    %s742 = scalar_lea.vmem [#allocation2], 32
    %v743 = vld [vmem:[%s742] ss:$2 sm:$0xff]
    %s744 = scalar_lea.vmem [#allocation2], 48
    %v745 = vld [vmem:[%s744] ss:$2 sm:$0xff]
    %s746 = scalar_lea.vmem [#allocation2], 33
    %v747 = vld [vmem:[%s746] ss:$2 sm:$0xff]
    %s748 = scalar_lea.vmem [#allocation2], 49
    %v749 = vld [vmem:[%s748] ss:$2 sm:$0xff]
    %v750 = vmax.f32 %v743, %v747
    %v751 = vmax.f32 %v745, %v749
    %vm752 = vcmp.gt.f32.partialorder %v750, 0.0
    %vm753 = vcmp.gt.f32.partialorder %v751, 0.0
    %v754 = vmin.f32 %v750, 0.0
    %v755 = vmin.f32 %v751, 0.0
    %v756 = vmul.f32 %v754, 1.442695
    %v757 = vpow.pop %v756
    %v758 = vmul.f32 %v755, 1.442695
    %v759 = vpow.pop %v758
    %v760 = vsub.f32 %v757, 1.0
    %v761 = vsub.f32 %v759, 1.0
    %v762 = vsel %vm752, %v750, %v760
    %v763 = vsel %vm753, %v751, %v761
    %s764 = scalar_lea.vmem [#allocation3], 16
    %765 = vst [vmem:[%s764] sm:$0xff] %v762
    %766 = vst [vmem:[%s764 + $0x8] sm:$0xff] %v763
    %s767 = scalar_lea.vmem [#allocation2], 64
    %v768 = vld [vmem:[%s767] ss:$2 sm:$0xff]
    %s769 = scalar_lea.vmem [#allocation2], 80
    %v770 = vld [vmem:[%s769] ss:$2 sm:$0xff]
    %s771 = scalar_lea.vmem [#allocation2], 65
    %v772 = vld [vmem:[%s771] ss:$2 sm:$0xff]
    %s773 = scalar_lea.vmem [#allocation2], 81
    %v774 = vld [vmem:[%s773] ss:$2 sm:$0xff]
    %v775 = vmax.f32 %v768, %v772
    %v776 = vmax.f32 %v770, %v774
    %vm777 = vcmp.gt.f32.partialorder %v775, 0.0
    %vm778 = vcmp.gt.f32.partialorder %v776, 0.0
    %v779 = vmin.f32 %v775, 0.0
    %v780 = vmin.f32 %v776, 0.0
    %v781 = vmul.f32 %v779, 1.442695
    %v782 = vpow.pop %v781
    %v783 = vmul.f32 %v780, 1.442695
    %v784 = vpow.pop %v783
    %v785 = vsub.f32 %v782, 1.0
    %v786 = vsub.f32 %v784, 1.0
    %v787 = vsel %vm777, %v775, %v785
    %v788 = vsel %vm778, %v776, %v786
    %s789 = scalar_lea.vmem [#allocation3], 32
    %790 = vst [vmem:[%s789] sm:$0xff] %v787
    %791 = vst [vmem:[%s789 + $0x8] sm:$0xff] %v788
    %s792 = scalar_lea.vmem [#allocation2], 96
    %v793 = vld [vmem:[%s792] ss:$2 sm:$0xff]
    %s794 = scalar_lea.vmem [#allocation2], 112
    %v795 = vld [vmem:[%s794] ss:$2 sm:$0xff]
    %s796 = scalar_lea.vmem [#allocation2], 97
    %v797 = vld [vmem:[%s796] ss:$2 sm:$0xff]
    %s798 = scalar_lea.vmem [#allocation2], 113
    %v799 = vld [vmem:[%s798] ss:$2 sm:$0xff]
    %v800 = vmax.f32 %v793, %v797
    %v801 = vmax.f32 %v795, %v799
    %vm802 = vcmp.gt.f32.partialorder %v800, 0.0
    %vm803 = vcmp.gt.f32.partialorder %v801, 0.0
    %v804 = vmin.f32 %v800, 0.0
    %v805 = vmin.f32 %v801, 0.0
    %v806 = vmul.f32 %v804, 1.442695
    %v807 = vpow.pop %v806
    %v808 = vmul.f32 %v805, 1.442695
    %v809 = vpow.pop %v808
    %v810 = vsub.f32 %v807, 1.0
    %v811 = vsub.f32 %v809, 1.0
    %v812 = vsel %vm802, %v800, %v810
    %v813 = vsel %vm803, %v801, %v811
    %s814 = scalar_lea.vmem [#allocation3], 48
    %815 = vst [vmem:[%s814] sm:$0xff] %v812
    %816 = vst [vmem:[%s814 + $0x8] sm:$0xff] %v813
    // Predicated region
    $region22: #{downsample_layer.1} parent=1 // pred_check
      _
    $region23: #{downsample_layer.1} parent=1 // pred_check_branch
      %818 = sbr.rel (0) target = $region25
    $region24: #{downsample_layer.1} parent=1 // pred_region
      %s820 = ssub.s32 1024, 1024
      %821 = vsyncadd [#allocation4], %s820
      %s822 = sshll.u32 [#allocation3], 4
      %s823 = int_to_ptr.vmem [resolvable:$true] %s822
      %828 = dma.vmem_to_hbm [thread:$0]  %s823, 1024, %s5, [#allocation4], 128, 128, 8
    $region25: #{downsample_layer.1} parent=1 // pred_fallthru
      _
    // Predicated region
    $region26: #{downsample_layer.1} parent=1 // pred_check
      _
    $region27: #{downsample_layer.1} parent=1 // pred_check_branch
      %830 = sbr.rel (0) target = $region29
    $region28: #{downsample_layer.1} parent=1 // pred_region
      %831 = dma.done [#allocation4], 1024
    $region29: #{downsample_layer.1} parent=1 // pred_fallthru
      _
    %832 = vsyncpa [#allocation4], 1

</llo_original>
